<compile_context>
chip_gen: v7x
topology: tpu7x:2x2x1
jax: 0.10.0
libtpu: 0.0.40
codegen_flags: <defaults>
</compile_context>

<pallas_src>
import jax
import jax.numpy as jnp
from jax.experimental import pallas as pl
from jax.experimental.pallas import tpu as pltpu


def _scale_kernel(scale_ref, x_ref, o_ref):
    # scale_ref: SMEM (1,) f32 scalar ; x_ref / o_ref: VMEM tiles.
    o_ref[...] = (x_ref[...] * scale_ref[0]).astype(o_ref.dtype)


_LANE_CANDIDATES = (4096, 2048, 1024, 512, 256, 128)


def _choose_lanes(size):
    """Largest lane width (multiple of 128) dividing `size`, preferring one
    that leaves at least 8 rows so sublanes are fully used."""
    best = None
    for lanes in _LANE_CANDIDATES:
        if size % lanes == 0:
            if best is None:
                best = lanes
            if size // lanes >= 8:
                return lanes
    return best


def _choose_block_rows(lead, lanes, itemsize):
    # Target ~2 MiB per tile buffer: double-buffered input + output is then
    # <= 8 MiB of pipeline VMEM (well under the default scoped limit on
    # v5e/v6e and under v7x's tighter budget), while big enough to amortize
    # the ~0.35 us per-grid-step overhead.
    target_bytes = 2 * 1024 * 1024
    rows = max(1, target_bytes // (lanes * itemsize))
    if rows >= lead:
        return lead                      # single block spans the leading dim
    return max(8, (rows // 8) * 8)       # keep tiles sublane-aligned


def _scale_2d(x2d, scale):
    lead, lanes = x2d.shape
    tm = _choose_block_rows(lead, lanes, x2d.dtype.itemsize)
    grid = (pl.cdiv(lead, tm),)
    return pl.pallas_call(
        _scale_kernel,
        out_shape=jax.ShapeDtypeStruct((lead, lanes), x2d.dtype),
        grid_spec=pl.GridSpec(
            grid=grid,
            in_specs=[
                pl.BlockSpec(memory_space=pltpu.SMEM),        # scalar param
                pl.BlockSpec((tm, lanes), lambda i: (i, 0)),  # input tile
            ],
            out_specs=pl.BlockSpec((tm, lanes), lambda i: (i, 0)),
        ),
        compiler_params=pltpu.CompilerParams(
            dimension_semantics=("parallel",),
        ),
    )(scale, x2d)


def scale_forward(x, scale):
    """x: any-shape array. scale: shape-(1,) f32 parameter. Returns x * scale."""
    orig_shape = x.shape
    size = x.size
    if size == 0:
        return x

    lanes = _choose_lanes(size)
    if lanes is not None:
        x2d = x.reshape(size // lanes, lanes)
        return _scale_2d(x2d, scale).reshape(orig_shape)

    # Ragged fallback: total size not a multiple of 128 — pad the flat view
    # up to a lane-dense slab, run the kernel, then drop the pad.
    lanes = 128
    padded = pl.cdiv(size, lanes) * lanes
    x_flat = jnp.pad(x.reshape(-1), (0, padded - size))
    out_flat = _scale_2d(x_flat.reshape(padded // lanes, lanes), scale)
    return out_flat.reshape(-1)[:size].reshape(orig_shape)


if __name__ == "__main__":
    key = jax.random.PRNGKey(0)
    # Small NCHW input consistent with a conv-feature-map use of Scale.
    x = jax.random.normal(key, (2, 4, 16, 16), dtype=jnp.float32)

    # Deterministic parameter init, matching nn.Parameter(torch.FloatTensor([0.001]))
    scale = jnp.array([0.001], dtype=jnp.float32)

    out = scale_forward(x, scale)
    out = jax.block_until_ready(out)

    # Reference check against plain JAX broadcasting semantics.
    ref = x * scale[0]
    assert out.shape == x.shape
    assert out.dtype == x.dtype
    assert jnp.allclose(out, ref, atol=1e-6, rtol=1e-6)

    print("KERNEL_OK")
</pallas_src>

<mosaic_0001>
module attributes {stable_mosaic.version = 11 : i64} {
  func.func @_scale_kernel(%arg0: i32, %arg1: memref<1xf32, #tpu.memory_space<smem>>, %arg2: memref<8x256xf32, #tpu.memory_space<vmem>>, %arg3: memref<8x256xf32, #tpu.memory_space<vmem>>) attributes {dimension_semantics = [#tpu.dimension_semantics<parallel>], iteration_bounds = array<i64: 1>, scalar_prefetch = 0 : i64, scratch_operands = 0 : i64, tpu.core_type = #tpu.core_type<tc>, window_params = [{transform_indices = @transform_0, window_bounds = array<i64: 1>}, {transform_indices = @transform_1, window_bounds = array<i64: 8, 256>}, {transform_indices = @transform_2, window_bounds = array<i64: 8, 256>}]} {
    %c0 = arith.constant 0 : index
    %c0_0 = arith.constant 0 : index
    %0 = vector.load %arg2[%c0, %c0_0] : memref<8x256xf32, #tpu.memory_space<vmem>>, vector<8x256xf32>
    %c0_1 = arith.constant 0 : index
    %1 = memref.load %arg1[%c0_1] : memref<1xf32, #tpu.memory_space<smem>>
    %2 = vector.broadcast %1 : f32 to vector<8x256xf32>
    %3 = arith.mulf %0, %2 : vector<8x256xf32>
    %c0_2 = arith.constant 0 : index
    %c0_3 = arith.constant 0 : index
    %4 = vector.load %arg3[%c0_2, %c0_3] : memref<8x256xf32, #tpu.memory_space<vmem>>, vector<8x256xf32>
    tpu.vector_store %arg3[%c0_2, %c0_3], %3 {strides = array<i32>} : memref<8x256xf32, #tpu.memory_space<vmem>>, vector<8x256xf32>,
    return
  }
  func.func @transform_0(%arg0: i32) -> i32 {
    %c0_i32 = arith.constant 0 : i32
    %c0_i32_0 = arith.constant 0 : i32
    return %c0_i32 : i32
  }
  func.func @transform_1(%arg0: i32) -> (i32, i32) {
    %c0_i32 = arith.constant 0 : i32
    %c0_i32_0 = arith.constant 0 : i32
    return %arg0, %c0_i32 : i32, i32
  }
  func.func @transform_2(%arg0: i32) -> (i32, i32) {
    %c0_i32 = arith.constant 0 : i32
    %c0_i32_0 = arith.constant 0 : i32
    return %arg0, %c0_i32 : i32, i32
  }
}

</mosaic_0001>

<llo_original>
// kernel: tpu_custom_call.1
$region0: #{tpu_custom_call.1}
  #allocation0 [shape = 'u32[]', space=smem, size = 0x4, offset = 0x4, fixed_abs, tag = 'smem constant byte address 0x4 - core index']
  #allocation1 [shape = 'u32[144,128]{1,0:T(1,128)}', space=vmem, size = 0x12000, scoped, tag = 'internal scratch']
  #allocation2 [shape = 'f32[1]{0:T(128)S(6)}', space=smem, size = 0x200, scoped, tag = 'scoped memory for tpu_custom_call.1']
  %s0 = inlined_call_operand.<no memory space> [shape: f32[1], index: 0, kind: input, shape index: {}]
  %s1 = inlined_call_operand.hbm [shape: f32[8,256], index: 1, kind: input, shape index: {}]
  %s2 = inlined_call_operand.hbm [shape: f32[8,256], index: 2, kind: output, shape index: {}]
  %s3 = sld [smem:[#allocation0]]
  $region22: #{tpu_custom_call.1} parent=0
    _
  %s5 = ssub.s32 1, %s3
  %s6 = scalar_select 0, %s5, %s3
  %7 = sst [smem:[#allocation2]] %s0
  $region1: #{tpu_custom_call.1} parent=0
    #allocation3 [shape = 'u8[8192]{0}', space=vmem, size = 0x2000, scoped, tag = 'input window, operand 1, single buffered']
    #allocation4 [shape = 's32[1]{0}', space=sflag, size = 0x4, scoped, tag = 'scoped memory for tpu_custom_call.1']
    #allocation5 [shape = 's32[1]{0}', space=sflag, size = 0x4, scoped, tag = 'scoped memory for tpu_custom_call.1']
    #allocation6 [shape = 'u8[8192]{0}', space=vmem, size = 0x2000, scoped, tag = 'output window, operand 0, single buffered']
    %8 = vsyncpa [#allocation4], 0
    %9 = vsyncpa [#allocation5], 0
    // Predicated region
    $region2: #{tpu_custom_call.1} parent=1 // pred_check
      _
    $region3: #{tpu_custom_call.1} parent=1 // pred_check_branch
      %11 = sbr.rel (0) target = $region5
    $region4: #{tpu_custom_call.1} parent=1 // pred_region
      _
    $region5: #{tpu_custom_call.1} parent=1 // pred_fallthru
      _
    // Predicated region
    $region6: #{tpu_custom_call.1} parent=1 // pred_check
      _
    $region7: #{tpu_custom_call.1} parent=1 // pred_check_branch
      %13 = sbr.rel (0) target = $region9
    $region8: #{tpu_custom_call.1} parent=1 // pred_region
      %s15 = ssub.s32 256, 256
      %16 = vsyncadd [#allocation4], %s15
      %s18 = sshll.u32 [#allocation3], 4
      %s19 = int_to_ptr.vmem [resolvable:$true] %s18
      %21 = dma.hbm_to_vmem [thread:$0]  %s1, 256, %s19, [#allocation4]
    $region9: #{tpu_custom_call.1} parent=1 // pred_fallthru
      _
    // Predicated region
    $region10: #{tpu_custom_call.1} parent=1 // pred_check
      _
    $region11: #{tpu_custom_call.1} parent=1 // pred_check_branch
      %23 = sbr.rel (0) target = $region13
    $region12: #{tpu_custom_call.1} parent=1 // pred_region
      %24 = dma.done [#allocation4], 256
    $region13: #{tpu_custom_call.1} parent=1 // pred_fallthru
      _
    %v25 = vld [vmem:[#allocation3] sm:$0xff]
    %v26 = vld [vmem:[#allocation3 + $0x8] sm:$0xff]
    %s27 = sld [smem:[#allocation2]]
    %v28 = vstv %s27
    %v29 = vmul.f32 %v25, %v28
    %v30 = vmul.f32 %v26, %v28
    %31 = vst [vmem:[#allocation6] sm:$0xff] %v29
    %32 = vst [vmem:[#allocation6 + $0x8] sm:$0xff] %v30
    // Predicated region
    $region14: #{tpu_custom_call.1} parent=1 // pred_check
      _
    $region15: #{tpu_custom_call.1} parent=1 // pred_check_branch
      %34 = sbr.rel (0) target = $region17
    $region16: #{tpu_custom_call.1} parent=1 // pred_region
      %s36 = ssub.s32 256, 256
      %37 = vsyncadd [#allocation5], %s36
      %s39 = sshll.u32 [#allocation6], 4
      %s40 = int_to_ptr.vmem [resolvable:$true] %s39
      %42 = dma.vmem_to_hbm [thread:$0]  %s40, 256, %s2, [#allocation5]
    $region17: #{tpu_custom_call.1} parent=1 // pred_fallthru
      _
    // Predicated region
    $region18: #{tpu_custom_call.1} parent=1 // pred_check
      _
    $region19: #{tpu_custom_call.1} parent=1 // pred_check_branch
      %44 = sbr.rel (0) target = $region21
    $region20: #{tpu_custom_call.1} parent=1 // pred_region
      %45 = dma.done [#allocation5], 256
    $region21: #{tpu_custom_call.1} parent=1 // pred_fallthru
      _
    %46 = vsyncpa [#allocation4], 1
    %47 = vsyncpa [#allocation5], 1

</llo_original>
